<compile_context>
chip_gen: v6e
topology: v6e:2x2x1
jax: 0.10.0
libtpu: 0.0.40
codegen_flags: <defaults>
</compile_context>

<pallas_src>
import functools

import jax
import jax.numpy as jnp
from jax.experimental import pallas as pl
from jax.experimental.pallas import tpu as pltpu


def _round_up(x, m):
    return (x + m - 1) // m * m


def _pool_project_normalize_kernel(x_ref, w_ref, b_ref, o_ref, acc_ref,
                                   *, inv_seq_len):
    # x_ref  : [TB, TS, Dp]  bf16 token embeddings (one S tile)
    # w_ref  : [Dp, Ep]      bf16 projection weight (resident across grid)
    # b_ref  : [1, Ep]       f32 effective bias  (mean(pos) @ W + b, padded)
    # o_ref  : [TB, Ep]      f32 L2-normalized embeddings (written at last S step)
    # acc_ref: [TB, Dp]      f32 running sequence sum (VMEM scratch)
    s = pl.program_id(1)

    @pl.when(s == 0)
    def _init():
        acc_ref[...] = jnp.zeros_like(acc_ref)

    # Partial sequence sum for this S tile; f32 accumulation.  Zero-padded
    # tail rows (ragged S) contribute nothing.
    acc_ref[...] += jnp.sum(x_ref[...].astype(jnp.float32), axis=1)

    @pl.when(s == pl.num_programs(1) - 1)
    def _finalize():
        # Mean over the *true* sequence length, then project on the MXU.
        pooled = (acc_ref[...] * inv_seq_len).astype(jnp.bfloat16)   # [TB, Dp]
        proj = jnp.dot(pooled, w_ref[...],
                       preferred_element_type=jnp.float32) + b_ref[...]
        # Padded E columns are exactly zero (W/bias pad cols are zero), so the
        # norm over the padded width equals the norm over the real E columns.
        sq = jnp.sum(proj * proj, axis=-1, keepdims=True)            # [TB, 1]
        o_ref[...] = proj * jax.lax.rsqrt(sq + 1e-12)


def encode_text(token_ids, emb_table, pos_emb, w_proj, b_proj):
    """Synthetic model_wrapper.encode_text(texts) -> [B, E] float32."""
    B, S = token_ids.shape
    V, D = emb_table.shape
    E = w_proj.shape[1]

    # ---- one-time parameter prep (lane-dense padding + pos folding) --------
    Dp = _round_up(D, 128)
    Ep = _round_up(E, 128)

    # Effective bias: mean(pos) @ W + b, computed in f32 on unpadded params.
    bias_eff = (jnp.mean(pos_emb.astype(jnp.float32), axis=0)
                @ w_proj.astype(jnp.float32)
                + b_proj.astype(jnp.float32))                       # [E]
    bias_eff = jnp.pad(bias_eff, (0, Ep - E)).reshape(1, Ep)        # [1, Ep]

    w_pad = jnp.pad(w_proj.astype(jnp.float32),
                    ((0, Dp - D), (0, Ep - E))).astype(jnp.bfloat16)  # [Dp, Ep]
    emb_bf16 = jnp.pad(emb_table.astype(jnp.bfloat16),
                       ((0, 0), (0, Dp - D)))                         # [V, Dp]

    # ---- embedding gather (XLA), streamed onward in bf16 -------------------
    x = jnp.take(emb_bf16, token_ids, axis=0)                        # [B, S, Dp] bf16

    # ---- tiling -------------------------------------------------------------
    # S tile: multiple of 8 sublanes, capped at 128; B tile: full B if small,
    # else 8-row tiles.  Per-buffer VMEM for x is TB*TS*Dp*2 bytes, which with
    # these caps stays far below the scoped VMEM limit on v5e/v6e/v7x; for
    # large real shapes grow TB/TS toward a few MiB per buffer (smaller on
    # v7x's 64 MiB VMEM, larger on v5e/v6e's 128 MiB).
    TS = min(128, _round_up(S, 8))
    S_pad = _round_up(S, TS)
    TB = B if B <= 8 else 8
    B_pad = _round_up(B, TB)

    if (B_pad, S_pad) != (B, S):
        x = jnp.pad(x, ((0, B_pad - B), (0, S_pad - S), (0, 0)))     # zero pad

    grid = (B_pad // TB, S_pad // TS)

    out = pl.pallas_call(
        functools.partial(_pool_project_normalize_kernel, inv_seq_len=1.0 / S),
        out_shape=jax.ShapeDtypeStruct((B_pad, Ep), jnp.float32),
        grid_spec=pltpu.PrefetchScalarGridSpec(
            num_scalar_prefetch=0,
            grid=grid,
            in_specs=[
                pl.BlockSpec((TB, TS, Dp), lambda b, s: (b, s, 0)),   # x stream
                pl.BlockSpec((Dp, Ep), lambda b, s: (0, 0)),          # W (resident)
                pl.BlockSpec((1, Ep), lambda b, s: (0, 0)),           # bias (resident)
            ],
            out_specs=pl.BlockSpec((TB, Ep), lambda b, s: (b, 0)),
            scratch_shapes=[pltpu.VMEM((TB, Dp), jnp.float32)],       # seq-sum acc
        ),
        compiler_params=pltpu.CompilerParams(
            dimension_semantics=("parallel", "arbitrary")),
    )(x, w_pad, bias_eff)

    return out[:B, :E]


class GeneralizedEmbeddingExtractorPallas:
    """Mirror of the PyTorch wrapper: forward/encode delegate to encode_text."""

    def __init__(self, params):
        self.params = params  # (emb_table, pos_emb, w_proj, b_proj)

    def forward(self, texts):
        return encode_text(texts, *self.params)

    def encode(self, texts):
        return self.forward(texts)

    __call__ = forward


def _reference_encode_text(token_ids, emb_table, pos_emb, w_proj, b_proj):
    x = jnp.take(emb_table, token_ids, axis=0) + pos_emb[None, :, :]
    pooled = jnp.mean(x, axis=1)
    proj = pooled @ w_proj + b_proj
    return proj / jnp.sqrt(jnp.sum(proj * proj, axis=-1, keepdims=True) + 1e-12)


if __name__ == "__main__":
    # Small, deterministic shapes: batch=2, seq=8, vocab=64, hidden=32, embed=32
    B, S, V, D, E = 2, 8, 64, 32, 32

    key = jax.random.PRNGKey(0)
    k_tok, k_emb, k_pos, k_w, k_b = jax.random.split(key, 5)

    texts = jax.random.randint(k_tok, (B, S), 0, V, dtype=jnp.int32)
    emb_table = jax.random.normal(k_emb, (V, D), dtype=jnp.float32) * 0.02
    pos_emb = jax.random.normal(k_pos, (S, D), dtype=jnp.float32) * 0.01
    w_proj = jax.random.normal(k_w, (D, E), dtype=jnp.float32) * (1.0 / D ** 0.5)
    b_proj = jax.random.normal(k_b, (E,), dtype=jnp.float32) * 0.01

    extractor = GeneralizedEmbeddingExtractorPallas(
        (emb_table, pos_emb, w_proj, b_proj))

    out = extractor(texts)
    jax.block_until_ready(out)

    ref = _reference_encode_text(texts, emb_table, pos_emb, w_proj, b_proj)
    assert out.shape == (B, E), out.shape
    # Tolerance accounts for bf16 streaming of the embeddings / bf16 MXU
    # operands (f32 accumulation); the f32 reference differs at ~1e-3 level
    # on the unit-normalized outputs.
    assert jnp.allclose(out, ref, atol=7.5e-3, rtol=1e-2), "mismatch vs reference"

    print("KERNEL_OK")
</pallas_src>

<mosaic_0001>
module attributes {stable_mosaic.version = 11 : i64} {
  func.func @_pool_project_normalize_kernel(%arg0: i32, %arg1: i32, %arg2: memref<2x8x128xbf16, #tpu.memory_space<vmem>>, %arg3: memref<128x128xbf16, #tpu.memory_space<vmem>>, %arg4: memref<1x128xf32, #tpu.memory_space<vmem>>, %arg5: memref<2x128xf32, #tpu.memory_space<vmem>>, %arg6: memref<2x128xf32, #tpu.memory_space<vmem>>) attributes {dimension_semantics = [#tpu.dimension_semantics<parallel>, #tpu.dimension_semantics<arbitrary>], iteration_bounds = array<i64: 1, 1>, scalar_prefetch = 0 : i64, scratch_operands = 1 : i64, tpu.core_type = #tpu.core_type<tc>, window_params = [{transform_indices = @transform_0, window_bounds = array<i64: 2, 8, 128>}, {pipeline_mode = #tpu.pipeline_mode<synchronous>, transform_indices = @transform_1, window_bounds = array<i64: 128, 128>}, {pipeline_mode = #tpu.pipeline_mode<synchronous>, transform_indices = @transform_2, window_bounds = array<i64: 1, 128>}, {transform_indices = @transform_3, window_bounds = array<i64: 2, 128>}]} {
    %c0_i32 = arith.constant 0 : i32
    %0 = arith.cmpi eq, %arg1, %c0_i32 : i32
    %1 = arith.extui %0 : i1 to i32
    %c0_i32_0 = arith.constant 0 : i32
    %2 = arith.cmpi ne, %1, %c0_i32_0 : i32
    scf.if %2 {
      %cst_9 = arith.constant 0.000000e+00 : f32
      %12 = vector.broadcast %cst_9 : f32 to vector<2x128xf32>
      %c0_10 = arith.constant 0 : index
      %c0_11 = arith.constant 0 : index
      %13 = vector.load %arg6[%c0_10, %c0_11] : memref<2x128xf32, #tpu.memory_space<vmem>>, vector<2x128xf32>
      tpu.vector_store %arg6[%c0_10, %c0_11], %12 {strides = array<i32>} : memref<2x128xf32, #tpu.memory_space<vmem>>, vector<2x128xf32>,
    } else {
    }
    %c0 = arith.constant 0 : index
    %c0_1 = arith.constant 0 : index
    %3 = vector.load %arg6[%c0, %c0_1] : memref<2x128xf32, #tpu.memory_space<vmem>>, vector<2x128xf32>
    %c0_2 = arith.constant 0 : index
    %c0_3 = arith.constant 0 : index
    %c0_4 = arith.constant 0 : index
    %4 = vector.load %arg2[%c0_2, %c0_3, %c0_4] : memref<2x8x128xbf16, #tpu.memory_space<vmem>>, vector<2x8x128xbf16>
    %5 = arith.extf %4 : vector<2x8x128xbf16> to vector<2x8x128xf32>
    %cst = arith.constant dense<0.000000e+00> : vector<2x128xf32>
    %6 = vector.multi_reduction <add>, %5, %cst [1] : vector<2x8x128xf32> to vector<2x128xf32>
    %7 = arith.addf %3, %6 : vector<2x128xf32>
    %c0_5 = arith.constant 0 : index
    %c0_6 = arith.constant 0 : index
    %8 = vector.load %arg6[%c0_5, %c0_6] : memref<2x128xf32, #tpu.memory_space<vmem>>, vector<2x128xf32>
    tpu.vector_store %arg6[%c0_5, %c0_6], %7 {strides = array<i32>} : memref<2x128xf32, #tpu.memory_space<vmem>>, vector<2x128xf32>,
    %c0_i32_7 = arith.constant 0 : i32
    %9 = arith.cmpi eq, %arg1, %c0_i32_7 : i32
    %10 = arith.extui %9 : i1 to i32
    %c0_i32_8 = arith.constant 0 : i32
    %11 = arith.cmpi ne, %10, %c0_i32_8 : i32
    scf.if %11 {
      %c0_9 = arith.constant 0 : index
      %c0_10 = arith.constant 0 : index
      %12 = vector.load %arg6[%c0_9, %c0_10] : memref<2x128xf32, #tpu.memory_space<vmem>>, vector<2x128xf32>
      %cst_11 = arith.constant 1.250000e-01 : f32
      %13 = vector.broadcast %cst_11 : f32 to vector<2x128xf32>
      %14 = arith.mulf %12, %13 : vector<2x128xf32>
      %15 = arith.truncf %14 : vector<2x128xf32> to vector<2x128xbf16>
      %c0_12 = arith.constant 0 : index
      %c0_13 = arith.constant 0 : index
      %16 = vector.load %arg3[%c0_12, %c0_13] : memref<128x128xbf16, #tpu.memory_space<vmem>>, vector<128x128xbf16>
      %cst_14 = arith.constant dense<0.000000e+00> : vector<2x128xf32>
      %17 = tpu.matmul %15, %16, %cst_14 {dimension_numbers = #tpu.dot_dimension_numbers<[1], [0], [0], [1], [0, 0, 1, 1], [], []>} : vector<2x128xbf16>, vector<128x128xbf16>, vector<2x128xf32> -> vector<2x128xf32>
      %c0_15 = arith.constant 0 : index
      %c0_16 = arith.constant 0 : index
      %18 = vector.load %arg4[%c0_15, %c0_16] : memref<1x128xf32, #tpu.memory_space<vmem>>, vector<1x128xf32>
      %19 = vector.broadcast %18 : vector<1x128xf32> to vector<2x128xf32>
      %20 = arith.addf %17, %19 : vector<2x128xf32>
      %21 = arith.mulf %20, %20 : vector<2x128xf32>
      %cst_17 = arith.constant dense<0.000000e+00> : vector<2xf32>
      %22 = vector.multi_reduction <add>, %21, %cst_17 [1] : vector<2x128xf32> to vector<2xf32>
      %23 = vector.shape_cast %22 : vector<2xf32> to vector<2x1xf32>
      %cst_18 = arith.constant 9.99999996E-13 : f32
      %24 = vector.broadcast %cst_18 : f32 to vector<2x1xf32>
      %25 = arith.addf %23, %24 : vector<2x1xf32>
      %26 = math.rsqrt %25 : vector<2x1xf32>
      %27 = vector.broadcast %26 : vector<2x1xf32> to vector<2x128xf32>
      %28 = arith.mulf %20, %27 : vector<2x128xf32>
      %c0_19 = arith.constant 0 : index
      %c0_20 = arith.constant 0 : index
      %29 = vector.load %arg5[%c0_19, %c0_20] : memref<2x128xf32, #tpu.memory_space<vmem>>, vector<2x128xf32>
      tpu.vector_store %arg5[%c0_19, %c0_20], %28 {strides = array<i32>} : memref<2x128xf32, #tpu.memory_space<vmem>>, vector<2x128xf32>,
    } else {
    }
    return
  }
  func.func @transform_0(%arg0: i32, %arg1: i32) -> (i32, i32, i32) {
    %c0_i32 = arith.constant 0 : i32
    %c0_i32_0 = arith.constant 0 : i32
    return %arg0, %arg1, %c0_i32 : i32, i32, i32
  }
  func.func @transform_1(%arg0: i32, %arg1: i32) -> (i32, i32) {
    %c0_i32 = arith.constant 0 : i32
    %c0_i32_0 = arith.constant 0 : i32
    %c0_i32_1 = arith.constant 0 : i32
    return %c0_i32, %c0_i32_0 : i32, i32
  }
  func.func @transform_2(%arg0: i32, %arg1: i32) -> (i32, i32) {
    %c0_i32 = arith.constant 0 : i32
    %c0_i32_0 = arith.constant 0 : i32
    %c0_i32_1 = arith.constant 0 : i32
    return %c0_i32, %c0_i32_0 : i32, i32
  }
  func.func @transform_3(%arg0: i32, %arg1: i32) -> (i32, i32) {
    %c0_i32 = arith.constant 0 : i32
    %c0_i32_0 = arith.constant 0 : i32
    return %arg0, %c0_i32 : i32, i32
  }
}

</mosaic_0001>

<llo_original>
// kernel: tpu_custom_call.1
$region0: #{tpu_custom_call.1}
  #allocation0 [shape = 'u32[]', space=smem, size = 0x4, offset = 0x4, fixed_abs, tag = 'smem constant byte address 0x4 - core index']
  #allocation1 [shape = 'u32[144,128]{1,0:T(1,128)}', space=vmem, size = 0x12000, scoped, tag = 'internal scratch']
  #allocation2 [shape = 'f32[2,128]{1,0:T(2,128)}', space=vmem, size = 0x400, scoped, tag = 'scratch operand']
  %s0 = inlined_call_operand.hbm [shape: bf16[2,8,128], index: 0, kind: input, shape index: {}]
  %s1 = inlined_call_operand.hbm [shape: bf16[128,128], index: 1, kind: input, shape index: {}]
  %s2 = inlined_call_operand.vmem [shape: f32[1,128], index: 2, kind: input, shape index: {}]
  %s3 = inlined_call_operand.hbm [shape: f32[2,128], index: 3, kind: output, shape index: {}]
  %s4 = sld [smem:[#allocation0]]
  $region38: #{tpu_custom_call.1} parent=0
    _
  %s6 = ssub.s32 1, %s4
  %s7 = scalar_select 0, %s6, %s4
  $region1: #{tpu_custom_call.1} parent=0
    #allocation3 [shape = 'u8[4096]{0}', space=vmem, size = 0x1000, scoped, tag = 'input window, operand 0, single buffered']
    #allocation4 [shape = 's32[1]{0}', space=sflag, size = 0x4, scoped, tag = 'scoped memory for tpu_custom_call.1']
    #allocation5 [shape = 's32[1]{0}', space=sflag, size = 0x4, scoped, tag = 'scoped memory for tpu_custom_call.1']
    #allocation6 [shape = 'u8[32768]{0}', space=vmem, size = 0x8000, scoped, tag = 'input window, operand 1, single buffered']
    #allocation7 [shape = 's32[1]{0}', space=sflag, size = 0x4, scoped, tag = 'scoped memory for tpu_custom_call.1']
    #allocation8 [shape = 'u8[1024]{0}', space=vmem, size = 0x400, scoped, tag = 'output window, operand 0, single buffered']
    %8 = vsyncpa [#allocation4], 0
    %9 = vsyncpa [#allocation7], 0
    %10 = vsyncpa [#allocation5], 0
    // Predicated region
    $region2: #{tpu_custom_call.1} parent=1 // pred_check
      _
    $region3: #{tpu_custom_call.1} parent=1 // pred_check_branch
      %12 = sbr.rel (0) target = $region5
    $region4: #{tpu_custom_call.1} parent=1 // pred_region
      %s14 = ssub.s32 128, 128
      %15 = vsyncadd [#allocation4], %s14
      %s16 = sshll.u32 [#allocation3], 4
      %s17 = int_to_ptr.vmem [resolvable:$true] %s16
      %22 = dma.hbm_to_vmem [thread:$0]  %s0, 128, %s17, [#allocation4], 64, 64, 4
    $region5: #{tpu_custom_call.1} parent=1 // pred_fallthru
      _
    // Predicated region
    $region6: #{tpu_custom_call.1} parent=1 // pred_check
      _
    $region7: #{tpu_custom_call.1} parent=1 // pred_check_branch
      %24 = sbr.rel (0) target = $region9
    $region8: #{tpu_custom_call.1} parent=1 // pred_region
      %s26 = ssub.s32 1024, 1024
      %27 = vsyncadd [#allocation7], %s26
      %s28 = sshll.u32 [#allocation6], 4
      %s29 = int_to_ptr.vmem [resolvable:$true] %s28
      %34 = dma.hbm_to_vmem [thread:$0]  %s1, 1024, %s29, [#allocation7], 64, 64, 4
    $region9: #{tpu_custom_call.1} parent=1 // pred_fallthru
      _
    // Predicated region
    $region10: #{tpu_custom_call.1} parent=1 // pred_check
      _
    $region11: #{tpu_custom_call.1} parent=1 // pred_check_branch
      %36 = sbr.rel (0) target = $region13
    $region12: #{tpu_custom_call.1} parent=1 // pred_region
      _
    $region13: #{tpu_custom_call.1} parent=1 // pred_fallthru
      _
    // Predicated region
    $region14: #{tpu_custom_call.1} parent=1 // pred_check
      _
    $region15: #{tpu_custom_call.1} parent=1 // pred_check_branch
      %38 = sbr.rel (0) target = $region17
    $region16: #{tpu_custom_call.1} parent=1 // pred_region
      %39 = dma.done [#allocation4], 128
    $region17: #{tpu_custom_call.1} parent=1 // pred_fallthru
      _
    // Predicated region
    $region18: #{tpu_custom_call.1} parent=1 // pred_check
      _
    $region19: #{tpu_custom_call.1} parent=1 // pred_check_branch
      %41 = sbr.rel (0) target = $region21
    $region20: #{tpu_custom_call.1} parent=1 // pred_region
      %42 = dma.done [#allocation7], 1024
    $region21: #{tpu_custom_call.1} parent=1 // pred_fallthru
      _
    %p44 = scmp.eq.s32.totalorder 0, 0
    // Predicated region
    $region22: #{tpu_custom_call.1} parent=1 // pred_check
      %p45 = pneg %p44
    $region23: #{tpu_custom_call.1} parent=1 // pred_check_branch
      %47 = sbr.rel (%p45) target = $region25
    $region24: #{tpu_custom_call.1} parent=1 // pred_region
      %48 = vst [vmem:[#allocation2] sm:$0x3] 0.0
    $region25: #{tpu_custom_call.1} parent=1 // pred_fallthru
      _
    %v49 = vld [vmem:[#allocation2] sm:$0x3]
    %v50 = vld [vmem:[#allocation3] sm:$0xf]
    %v51 = vld [vmem:[#allocation3 + $0x4] sm:$0xf]
    %v52 = vunpack.c.l.bf16 %v50
    %v53 = vunpack.c.l.bf16 %v51
    %v54 = vrot.slane %v52, 4
    %v55 = vadd.f32 %v52, %v54
    %v56 = vrot.slane %v55, 2
    %v57 = vadd.f32 %v55, %v56
    %v58 = vrot.slane %v57, 1
    %v59 = vadd.f32 %v57, %v58
    %v60 = vrot.slane %v53, 4
    %v61 = vadd.f32 %v53, %v60
    %v62 = vrot.slane %v61, 2
    %v63 = vadd.f32 %v61, %v62
    %v64 = vrot.slane %v63, 1
    %v65 = vadd.f32 %v63, %v64
    %vm68 = vcmask 1041409
    %v69 = vsel %vm68, %v65, %v59
    %v71 = vadd.f32 %v49, %v69
    %72 = vst [vmem:[#allocation2] sm:$0x3] %v71
    // Predicated region
    $region26: #{tpu_custom_call.1} parent=1 // pred_check
      %p73 = pneg %p44
    $region27: #{tpu_custom_call.1} parent=1 // pred_check_branch
      %75 = sbr.rel (%p73) target = $region29
    $region28: #{tpu_custom_call.1} parent=1 // pred_region
      %v76 = vld [vmem:[#allocation2] sm:$0x3]
      %v77 = vmul.f32 %v76, 0.125
      %v78 = vpack.c.bf16 %v77, %v77
      %v79 = vld [vmem:[#allocation6] sm:$0xf]
      %v80 = vld [vmem:[#allocation6 + $0x4] sm:$0xf]
      %v81 = vld [vmem:[#allocation6 + $0x8] sm:$0xf]
      %v82 = vld [vmem:[#allocation6 + $0xc] sm:$0xf]
      %v83 = vld [vmem:[#allocation6 + $0x10] sm:$0xf]
      %v84 = vld [vmem:[#allocation6 + $0x14] sm:$0xf]
      %v85 = vld [vmem:[#allocation6 + $0x18] sm:$0xf]
      %v86 = vld [vmem:[#allocation6 + $0x1c] sm:$0xf]
      %v87 = vld [vmem:[#allocation6 + $0x20] sm:$0xf]
      %v88 = vld [vmem:[#allocation6 + $0x24] sm:$0xf]
      %v89 = vld [vmem:[#allocation6 + $0x28] sm:$0xf]
      %v90 = vld [vmem:[#allocation6 + $0x2c] sm:$0xf]
      %v91 = vld [vmem:[#allocation6 + $0x30] sm:$0xf]
      %v92 = vld [vmem:[#allocation6 + $0x34] sm:$0xf]
      %v93 = vld [vmem:[#allocation6 + $0x38] sm:$0xf]
      %v94 = vld [vmem:[#allocation6 + $0x3c] sm:$0xf]
      %v95 = vld [vmem:[%s2] sm:$0x1]
      %v97 = vlaneseq
      %v98 = vshrl.u32 %v97, 7
      %v99 = vsub.s32 0, %v98
      %v100 = vrot.slane %v95, %v99
      %v118 = vunpack.c.l.b16 %v79
      %v119 = vunpack.c.l.b16 %v80
      %v120 = vunpack.c.l.b16 %v81
      %v121 = vunpack.c.l.b16 %v82
      %v122 = vunpack.c.l.b16 %v83
      %v123 = vunpack.c.l.b16 %v84
      %v124 = vunpack.c.l.b16 %v85
      %v125 = vunpack.c.l.b16 %v86
      %v126 = vunpack.c.l.b16 %v87
      %v127 = vunpack.c.l.b16 %v88
      %v128 = vunpack.c.l.b16 %v89
      %v129 = vunpack.c.l.b16 %v90
      %v130 = vunpack.c.l.b16 %v91
      %v131 = vunpack.c.l.b16 %v92
      %v132 = vunpack.c.l.b16 %v93
      %v133 = vunpack.c.l.b16 %v94
      %v134 = vpack.c.b16 %v119, %v118
      %v135 = vpack.c.b16 %v121, %v120
      %v136 = vpack.c.b16 %v123, %v122
      %v137 = vpack.c.b16 %v125, %v124
      %v138 = vpack.c.b16 %v127, %v126
      %v139 = vpack.c.b16 %v129, %v128
      %v140 = vpack.c.b16 %v131, %v130
      %v141 = vpack.c.b16 %v133, %v132
      %150 = vmatprep.subr.bf16.mxu0 0
      %151 = vmatpush1.bf16.msra.mxu0 %v141
      %152 = vmatprep.subr.bf16.mxu0 0
      %153 = vmatpush1.bf16.msra.mxu0 %v140
      %154 = vmatprep.subr.bf16.mxu0 0
      %155 = vmatpush1.bf16.msra.mxu0 %v139
      %156 = vmatprep.subr.bf16.mxu0 0
      %157 = vmatpush1.bf16.msra.mxu0 %v138
      %158 = vmatprep.subr.bf16.mxu0 0
      %159 = vmatpush1.bf16.msra.mxu0 %v137
      %160 = vmatprep.subr.bf16.mxu0 0
      %161 = vmatpush1.bf16.msra.mxu0 %v136
      %162 = vmatprep.subr.bf16.mxu0 0
      %163 = vmatpush1.bf16.msra.mxu0 %v135
      %164 = vmatprep.subr.bf16.mxu0 0
      %165 = vmatpush1.bf16.msra.mxu0 %v134
      %166 = vmatprep.subr.bf16.mxu0 0
      %167 = vmatpush2.bf16.msra.mxu0 0
      %168 = vmatprep.subr.bf16.mxu0 0
      %169 = vmatpush2.bf16.msra.mxu0 0
      %170 = vmatprep.subr.bf16.mxu0 0
      %171 = vmatpush2.bf16.msra.mxu0 0
      %172 = vmatprep.subr.bf16.mxu0 0
      %173 = vmatpush2.bf16.msra.mxu0 0
      %174 = vmatprep.subr.bf16.mxu0 0
      %175 = vmatpush2.bf16.msra.mxu0 0
      %176 = vmatprep.subr.bf16.mxu0 0
      %177 = vmatpush2.bf16.msra.mxu0 0
      %178 = vmatprep.subr.bf16.mxu0 0
      %179 = vmatpush2.bf16.msra.mxu0 0
      %180 = vmatprep.subr.bf16.mxu0 0
      %181 = vmatpush2.bf16.msra.mxu0 0
      %182 = vmatprep.mubr.bf16.mxu0 0
      %183 = vmatmul.mubr.bf16.gmra.mxu0 %v78
      %v184 = vpop.f32.mrf.mxu0
      %v185 = vadd.f32 %v100, %v184
      %v186 = vpop.f32.mrf.mxu0
      %v187 = vpop.f32.mrf.mxu0
      %v188 = vpop.f32.mrf.mxu0
      %189 = vdwg.mxu0
      %v190 = vmul.f32 %v185, %v185
      %vm191 = vcmask 1041408
      %v192 = vsel %vm191, %v190, 0.0
      %193 = vadd.xlane.f32.xlu0 %v192
      %v194 = vpop.xlane.xlu0 %193
      %v195 = vadd.f32 %v194, 1e-12
      %v196 = vrsqrt.pop %v195
      %v197 = vmul.f32 %v185, %v196
      %198 = vst [vmem:[#allocation8] sm:$0x3] %v197
    $region29: #{tpu_custom_call.1} parent=1 // pred_fallthru
      _
    // Predicated region
    $region30: #{tpu_custom_call.1} parent=1 // pred_check
      _
    $region31: #{tpu_custom_call.1} parent=1 // pred_check_branch
      %200 = sbr.rel (0) target = $region33
    $region32: #{tpu_custom_call.1} parent=1 // pred_region
      %s202 = ssub.s32 32, 32
      %203 = vsyncadd [#allocation5], %s202
      %s205 = sshll.u32 [#allocation8], 4
      %s206 = int_to_ptr.vmem [resolvable:$true] %s205
      %208 = dma.vmem_to_hbm [thread:$0]  %s206, 32, %s3, [#allocation5]
    $region33: #{tpu_custom_call.1} parent=1 // pred_fallthru
      _
    // Predicated region
    $region34: #{tpu_custom_call.1} parent=1 // pred_check
      _
    $region35: #{tpu_custom_call.1} parent=1 // pred_check_branch
      %210 = sbr.rel (0) target = $region37
    $region36: #{tpu_custom_call.1} parent=1 // pred_region
      %211 = dma.done [#allocation5], 32
    $region37: #{tpu_custom_call.1} parent=1 // pred_fallthru
      _
    %212 = vsyncpa [#allocation4], 1
    %213 = vsyncpa [#allocation7], 1
    %214 = vsyncpa [#allocation5], 1

</llo_original>
